<compile_context>
chip_gen: v7x
topology: tpu7x:2x2x1
jax: 0.10.0
libtpu: 0.0.40
codegen_flags: <defaults>
</compile_context>

<pallas_src>
import functools

import jax
import jax.numpy as jnp
from jax.experimental import pallas as pl
from jax.experimental.pallas import tpu as pltpu


def _round_up(x, m):
    return (x + m - 1) // m * m


# ----------------------------------------------------------------------------
# Pallas kernel: fused  silu(X@W1 + b1) @ W2 + b2   (conv-stem + 1x1 head)
# ----------------------------------------------------------------------------
def _fused_stem_head_kernel(x_ref, w1_ref, b1_ref, w2_ref, b2_ref, o_ref):
    # conv1 (as GEMM): bf16 operands, f32 accumulation on the MXU
    h = jnp.dot(x_ref[...], w1_ref[...], preferred_element_type=jnp.float32)
    h = h + b1_ref[...]                      # (1, C1) broadcasts over rows, f32
    h = h * jax.nn.sigmoid(h)                # SiLU in f32 (EUP)
    # 1x1 head (as GEMM); intermediate stays in vregs/VMEM, never hits HBM
    o = jnp.dot(h.astype(jnp.bfloat16), w2_ref[...],
                preferred_element_type=jnp.float32)
    o_ref[...] = (o + b2_ref[...]).astype(o_ref.dtype)


def fused_stem_head(x, w1, b1, w2, b2, *, tm=1024):
    """out = silu(x @ w1 + b1) @ w2 + b2 in one tiled, pipelined Pallas kernel.

    x: (M, K) bf16; w1: (K, C1) bf16; b1: (1, C1) f32;
    w2: (C1, N) bf16; b2: (1, N) f32.  K, C1, N are already padded
    (K multiple of 8, C1/N multiples of 128) so every operand is lane-dense.
    """
    M, K = x.shape
    K2, C1 = w1.shape
    C12, N = w2.shape
    assert K == K2 and C1 == C12

    TM = min(tm, _round_up(M, 8))
    Mp = _round_up(M, TM)
    if Mp != M:
        x = jnp.pad(x, ((0, Mp - M), (0, 0)))

    out = pl.pallas_call(
        _fused_stem_head_kernel,
        out_shape=jax.ShapeDtypeStruct((Mp, N), jnp.float32),
        grid=(Mp // TM,),
        in_specs=[
            pl.BlockSpec((TM, K), lambda i: (i, 0)),    # X tile, pipelined over M
            pl.BlockSpec((K, C1), lambda i: (0, 0)),    # W1 resident
            pl.BlockSpec((1, C1), lambda i: (0, 0)),    # b1 resident
            pl.BlockSpec((C1, N), lambda i: (0, 0)),    # W2 resident
            pl.BlockSpec((1, N), lambda i: (0, 0)),     # b2 resident
        ],
        out_specs=pl.BlockSpec((TM, N), lambda i: (i, 0)),
        compiler_params=pltpu.CompilerParams(
            dimension_semantics=("parallel",),          # megacore split on v7x
        ),
    )(x, w1, b1, w2, b2)
    return out[:M]


# ----------------------------------------------------------------------------
# im2col glue (plain JAX; static Python loops over the 3x3 window)
# ----------------------------------------------------------------------------
def im2col(x_nhwc, kh, kw, stride, pad):
    x = jnp.pad(x_nhwc, ((0, 0), (pad, pad), (pad, pad), (0, 0)))
    n, h, w, c = x.shape
    ho = (h - kh) // stride + 1
    wo = (w - kw) // stride + 1
    patches = []
    for i in range(kh):
        for j in range(kw):
            patches.append(
                x[:, i : i + ho * stride : stride, j : j + wo * stride : stride, :]
            )
    cols = jnp.concatenate(patches, axis=-1)          # (n, ho, wo, kh*kw*c)
    return cols.reshape(n * ho * wo, kh * kw * c), (n, ho, wo)


# ----------------------------------------------------------------------------
# Synthetic "TorchScript" detection model + LoadModel-equivalent wrapper
# ----------------------------------------------------------------------------
class LoadModelPallas:
    """JAX/Pallas equivalent of LoadModel.forward (fp16=False, fp32 model)."""

    def __init__(self, c_in=3, c_mid=16, num_classes=4, num_anchors=3, seed=0,
                 tm=1024):
        self.fp16 = False
        self.stride = 32
        self.tm = tm
        no = num_anchors * (5 + num_classes)          # YOLO head channel count
        self.no = no
        self.c_in = c_in
        self.c_mid = c_mid

        k = jax.random.PRNGKey(seed)
        k1, k2, k3, k4 = jax.random.split(k, 4)
        # conv1: 3x3, stride 2, pad 1, c_in -> c_mid   (PyTorch layout OIHW)
        self.w1 = 0.05 * jax.random.normal(k1, (c_mid, c_in, 3, 3), jnp.float32)
        self.b1 = 0.01 * jax.random.normal(k2, (c_mid,), jnp.float32)
        # head: 1x1 conv, c_mid -> no
        self.w2 = 0.05 * jax.random.normal(k3, (no, c_mid, 1, 1), jnp.float32)
        self.b2 = 0.01 * jax.random.normal(k4, (no,), jnp.float32)

        # ---- pre-pack padded, bf16 GEMM operands once (resident in VMEM) ----
        K = 3 * 3 * c_in
        self.kp = _round_up(K, 32)        # sublane-aligned contraction dim
        self.c1p = _round_up(c_mid, 128)  # lane-dense hidden channels
        self.np_ = _round_up(no, 128)     # lane-dense head channels

        w1_g = jnp.transpose(self.w1, (2, 3, 1, 0)).reshape(K, c_mid)
        w1_g = jnp.pad(w1_g, ((0, self.kp - K), (0, self.c1p - c_mid)))
        self.w1_gemm = w1_g.astype(jnp.bfloat16)
        self.b1_gemm = jnp.pad(self.b1, (0, self.c1p - c_mid)
                               ).reshape(1, self.c1p).astype(jnp.float32)

        w2_g = jnp.transpose(self.w2, (2, 3, 1, 0)).reshape(c_mid, no)
        w2_g = jnp.pad(w2_g, ((0, self.c1p - c_mid), (0, self.np_ - no)))
        self.w2_gemm = w2_g.astype(jnp.bfloat16)
        self.b2_gemm = jnp.pad(self.b2, (0, self.np_ - no)
                               ).reshape(1, self.np_).astype(jnp.float32)

    def _model(self, im_nchw):
        """Stand-in for the jit-loaded torchscript model. Returns a 1-tuple."""
        x = jnp.transpose(im_nchw, (0, 2, 3, 1))      # NCHW -> NHWC once
        cols, (n, ho, wo) = im2col(x, 3, 3, stride=2, pad=1)
        M, K = cols.shape
        cols = jnp.pad(cols, ((0, 0), (0, self.kp - K))).astype(jnp.bfloat16)
        y = fused_stem_head(cols, self.w1_gemm, self.b1_gemm,
                            self.w2_gemm, self.b2_gemm, tm=self.tm)
        y = y[:, : self.no].reshape(n, ho, wo, self.no)   # drop channel padding
        # NHWC -> NCHW only once, on the small final output (PyTorch convention)
        out = jnp.transpose(y, (0, 3, 1, 2))
        return (out,)

    def forward(self, im):
        if self.fp16 and im.dtype != jnp.float16:
            im = im.astype(jnp.float16)
        y = self._model(im.astype(jnp.float32))
        if isinstance(y, (list, tuple)):
            # from_numpy is identity for device arrays
            return y[0] if len(y) == 1 else [x for x in y]
        return y

    __call__ = forward


# ----------------------------------------------------------------------------
# Pure-JAX reference (f32 convs) for a correctness check
# ----------------------------------------------------------------------------
def _reference(model, im):
    x = im.astype(jnp.float32)
    y = jax.lax.conv_general_dilated(
        x, model.w1, window_strides=(2, 2), padding=((1, 1), (1, 1)),
        dimension_numbers=("NCHW", "OIHW", "NCHW"))
    y = y + model.b1.reshape(1, -1, 1, 1)
    y = y * jax.nn.sigmoid(y)
    z = jax.lax.conv_general_dilated(
        y, model.w2, window_strides=(1, 1), padding="VALID",
        dimension_numbers=("NCHW", "OIHW", "NCHW"))
    z = z + model.b2.reshape(1, -1, 1, 1)
    return z


if __name__ == "__main__":
    key = jax.random.PRNGKey(0)
    # Small NCHW detection input: batch=2, channels=3, spatial=16x16
    im = jax.random.normal(key, (2, 3, 16, 16), dtype=jnp.float32)

    model = LoadModelPallas(c_in=3, c_mid=16, num_classes=4, num_anchors=3,
                            seed=0)
    out = model(im)
    out = jax.block_until_ready(out)

    # Sanity: output is NCHW with no=3*(5+4)=27 channels at stride-2 resolution
    assert out.shape == (2, 27, 8, 8), out.shape
    assert out.dtype == jnp.float32
    assert bool(jnp.all(jnp.isfinite(out)))

    # Numerical check vs f32 conv reference (bf16 MXU inputs -> loose tol)
    ref = jax.block_until_ready(_reference(model, im))
    max_err = float(jnp.max(jnp.abs(out - ref)))
    assert max_err < 3e-2, f"max abs err {max_err}"

    print("KERNEL_OK")
</pallas_src>

<mosaic_0001>
module attributes {stable_mosaic.version = 11 : i64} {
  func.func @_fused_stem_head_kernel(%arg0: i32, %arg1: memref<128x32xbf16, #tpu.memory_space<vmem>>, %arg2: memref<32x128xbf16, #tpu.memory_space<vmem>>, %arg3: memref<1x128xf32, #tpu.memory_space<vmem>>, %arg4: memref<128x128xbf16, #tpu.memory_space<vmem>>, %arg5: memref<1x128xf32, #tpu.memory_space<vmem>>, %arg6: memref<128x128xf32, #tpu.memory_space<vmem>>) attributes {dimension_semantics = [#tpu.dimension_semantics<parallel>], iteration_bounds = array<i64: 1>, scalar_prefetch = 0 : i64, scratch_operands = 0 : i64, tpu.core_type = #tpu.core_type<tc>, window_params = [{transform_indices = @transform_0, window_bounds = array<i64: 128, 32>}, {pipeline_mode = #tpu.pipeline_mode<synchronous>, transform_indices = @transform_1, window_bounds = array<i64: 32, 128>}, {pipeline_mode = #tpu.pipeline_mode<synchronous>, transform_indices = @transform_2, window_bounds = array<i64: 1, 128>}, {pipeline_mode = #tpu.pipeline_mode<synchronous>, transform_indices = @transform_3, window_bounds = array<i64: 128, 128>}, {pipeline_mode = #tpu.pipeline_mode<synchronous>, transform_indices = @transform_4, window_bounds = array<i64: 1, 128>}, {transform_indices = @transform_5, window_bounds = array<i64: 128, 128>}]} {
    %c0 = arith.constant 0 : index
    %c0_0 = arith.constant 0 : index
    %0 = vector.load %arg1[%c0, %c0_0] : memref<128x32xbf16, #tpu.memory_space<vmem>>, vector<128x32xbf16>
    %c0_1 = arith.constant 0 : index
    %c0_2 = arith.constant 0 : index
    %1 = vector.load %arg2[%c0_1, %c0_2] : memref<32x128xbf16, #tpu.memory_space<vmem>>, vector<32x128xbf16>
    %cst = arith.constant dense<0.000000e+00> : vector<128x128xf32>
    %2 = tpu.matmul %0, %1, %cst {dimension_numbers = #tpu.dot_dimension_numbers<[1], [0], [0], [1], [0, 0, 1, 1], [], []>} : vector<128x32xbf16>, vector<32x128xbf16>, vector<128x128xf32> -> vector<128x128xf32>
    %c0_3 = arith.constant 0 : index
    %c0_4 = arith.constant 0 : index
    %3 = vector.load %arg3[%c0_3, %c0_4] : memref<1x128xf32, #tpu.memory_space<vmem>>, vector<1x128xf32>
    %4 = vector.broadcast %3 : vector<1x128xf32> to vector<128x128xf32>
    %5 = arith.addf %2, %4 : vector<128x128xf32>
    %6 = arith.negf %5 : vector<128x128xf32>
    %7 = math.exp %6 : vector<128x128xf32>
    %cst_5 = arith.constant 1.000000e+00 : f32
    %8 = vector.broadcast %cst_5 : f32 to vector<128x128xf32>
    %9 = arith.addf %8, %7 : vector<128x128xf32>
    %10 = arith.divf %8, %9 : vector<128x128xf32>
    %11 = arith.mulf %5, %10 : vector<128x128xf32>
    %12 = arith.truncf %11 : vector<128x128xf32> to vector<128x128xbf16>
    %c0_6 = arith.constant 0 : index
    %c0_7 = arith.constant 0 : index
    %13 = vector.load %arg4[%c0_6, %c0_7] : memref<128x128xbf16, #tpu.memory_space<vmem>>, vector<128x128xbf16>
    %cst_8 = arith.constant dense<0.000000e+00> : vector<128x128xf32>
    %14 = tpu.matmul %12, %13, %cst_8 {dimension_numbers = #tpu.dot_dimension_numbers<[1], [0], [0], [1], [0, 0, 1, 1], [], []>} : vector<128x128xbf16>, vector<128x128xbf16>, vector<128x128xf32> -> vector<128x128xf32>
    %c0_9 = arith.constant 0 : index
    %c0_10 = arith.constant 0 : index
    %15 = vector.load %arg5[%c0_9, %c0_10] : memref<1x128xf32, #tpu.memory_space<vmem>>, vector<1x128xf32>
    %16 = vector.broadcast %15 : vector<1x128xf32> to vector<128x128xf32>
    %17 = arith.addf %14, %16 : vector<128x128xf32>
    %c0_11 = arith.constant 0 : index
    %c0_12 = arith.constant 0 : index
    %18 = vector.load %arg6[%c0_11, %c0_12] : memref<128x128xf32, #tpu.memory_space<vmem>>, vector<128x128xf32>
    tpu.vector_store %arg6[%c0_11, %c0_12], %17 {strides = array<i32>} : memref<128x128xf32, #tpu.memory_space<vmem>>, vector<128x128xf32>,
    return
  }
  func.func @transform_0(%arg0: i32) -> (i32, i32) {
    %c0_i32 = arith.constant 0 : i32
    %c0_i32_0 = arith.constant 0 : i32
    return %arg0, %c0_i32 : i32, i32
  }
  func.func @transform_1(%arg0: i32) -> (i32, i32) {
    %c0_i32 = arith.constant 0 : i32
    %c0_i32_0 = arith.constant 0 : i32
    %c0_i32_1 = arith.constant 0 : i32
    return %c0_i32, %c0_i32_0 : i32, i32
  }
  func.func @transform_2(%arg0: i32) -> (i32, i32) {
    %c0_i32 = arith.constant 0 : i32
    %c0_i32_0 = arith.constant 0 : i32
    %c0_i32_1 = arith.constant 0 : i32
    return %c0_i32, %c0_i32_0 : i32, i32
  }
  func.func @transform_3(%arg0: i32) -> (i32, i32) {
    %c0_i32 = arith.constant 0 : i32
    %c0_i32_0 = arith.constant 0 : i32
    %c0_i32_1 = arith.constant 0 : i32
    return %c0_i32, %c0_i32_0 : i32, i32
  }
  func.func @transform_4(%arg0: i32) -> (i32, i32) {
    %c0_i32 = arith.constant 0 : i32
    %c0_i32_0 = arith.constant 0 : i32
    %c0_i32_1 = arith.constant 0 : i32
    return %c0_i32, %c0_i32_0 : i32, i32
  }
  func.func @transform_5(%arg0: i32) -> (i32, i32) {
    %c0_i32 = arith.constant 0 : i32
    %c0_i32_0 = arith.constant 0 : i32
    return %arg0, %c0_i32 : i32, i32
  }
}

</mosaic_0001>

<llo_original>
// kernel: tpu_custom_call.1
$region0: #{tpu_custom_call.1}
  #allocation0 [shape = 'u32[]', space=smem, size = 0x4, offset = 0x4, fixed_abs, tag = 'smem constant byte address 0x4 - core index']
  #allocation1 [shape = 'u32[144,128]{1,0:T(1,128)}', space=vmem, size = 0x12000, scoped, tag = 'internal scratch']
  %s0 = inlined_call_operand.vmem [shape: bf16[128,32], index: 0, kind: input, shape index: {}]
  %s1 = inlined_call_operand.vmem [shape: bf16[32,128], index: 1, kind: input, shape index: {}]
  %s2 = inlined_call_operand.vmem [shape: f32[1,128], index: 2, kind: input, shape index: {}]
  %s3 = inlined_call_operand.vmem [shape: bf16[128,128], index: 3, kind: input, shape index: {}]
  %s4 = inlined_call_operand.vmem [shape: f32[1,128], index: 4, kind: input, shape index: {}]
  %s5 = inlined_call_operand.hbm [shape: f32[128,128], index: 5, kind: output, shape index: {}]
  %s6 = sld [smem:[#allocation0]]
  $region30: #{tpu_custom_call.1} parent=0
    _
  %s8 = ssub.s32 1, %s6
  %s9 = scalar_select 0, %s8, %s6
  $region1: #{tpu_custom_call.1} parent=0
    #allocation2 [shape = 'u8[65536]{0}', space=vmem, size = 0x10000, scoped, tag = 'output window, operand 0, single buffered']
    #allocation3 [shape = 's32[1]{0}', space=sflag, size = 0x4, scoped, tag = 'scoped memory for tpu_custom_call.1']
    %10 = vsyncpa [#allocation3], 0
    // Predicated region
    $region2: #{tpu_custom_call.1} parent=1 // pred_check
      _
    $region3: #{tpu_custom_call.1} parent=1 // pred_check_branch
      %12 = sbr.rel (0) target = $region5
    $region4: #{tpu_custom_call.1} parent=1 // pred_region
      _
    $region5: #{tpu_custom_call.1} parent=1 // pred_fallthru
      _
    // Predicated region
    $region6: #{tpu_custom_call.1} parent=1 // pred_check
      _
    $region7: #{tpu_custom_call.1} parent=1 // pred_check_branch
      %14 = sbr.rel (0) target = $region9
    $region8: #{tpu_custom_call.1} parent=1 // pred_region
      _
    $region9: #{tpu_custom_call.1} parent=1 // pred_fallthru
      _
    // Predicated region
    $region10: #{tpu_custom_call.1} parent=1 // pred_check
      _
    $region11: #{tpu_custom_call.1} parent=1 // pred_check_branch
      %16 = sbr.rel (0) target = $region13
    $region12: #{tpu_custom_call.1} parent=1 // pred_region
      _
    $region13: #{tpu_custom_call.1} parent=1 // pred_fallthru
      _
    // Predicated region
    $region14: #{tpu_custom_call.1} parent=1 // pred_check
      _
    $region15: #{tpu_custom_call.1} parent=1 // pred_check_branch
      %18 = sbr.rel (0) target = $region17
    $region16: #{tpu_custom_call.1} parent=1 // pred_region
      _
    $region17: #{tpu_custom_call.1} parent=1 // pred_fallthru
      _
    // Predicated region
    $region18: #{tpu_custom_call.1} parent=1 // pred_check
      _
    $region19: #{tpu_custom_call.1} parent=1 // pred_check_branch
      %20 = sbr.rel (0) target = $region21
    $region20: #{tpu_custom_call.1} parent=1 // pred_region
      _
    $region21: #{tpu_custom_call.1} parent=1 // pred_fallthru
      _
    %v22 = vld [vmem:[%s0] sm:$0xf]
    %v23 = vld [vmem:[%s0 + $0x4] sm:$0xf]
    %v24 = vld [vmem:[%s0 + $0x8] sm:$0xf]
    %v25 = vld [vmem:[%s0 + $0xc] sm:$0xf]
    %v26 = vld [vmem:[%s0 + $0x10] sm:$0xf]
    %v27 = vld [vmem:[%s0 + $0x14] sm:$0xf]
    %v28 = vld [vmem:[%s0 + $0x18] sm:$0xf]
    %v29 = vld [vmem:[%s0 + $0x1c] sm:$0xf]
    %v30 = vld [vmem:[%s0 + $0x20] sm:$0xf]
    %v31 = vld [vmem:[%s0 + $0x24] sm:$0xf]
    %v32 = vld [vmem:[%s0 + $0x28] sm:$0xf]
    %v33 = vld [vmem:[%s0 + $0x2c] sm:$0xf]
    %v34 = vld [vmem:[%s0 + $0x30] sm:$0xf]
    %v35 = vld [vmem:[%s0 + $0x34] sm:$0xf]
    %v36 = vld [vmem:[%s0 + $0x38] sm:$0xf]
    %v37 = vld [vmem:[%s0 + $0x3c] sm:$0xf]
    %v38 = vld [vmem:[%s1] sm:$0xf]
    %v39 = vld [vmem:[%s1 + $0x4] sm:$0xf]
    %v40 = vld [vmem:[%s1 + $0x8] sm:$0xf]
    %v41 = vld [vmem:[%s1 + $0xc] sm:$0xf]
    %v42 = vld [vmem:[%s2] sm:$0x1]
    %v44 = vlaneseq
    %v45 = vshrl.u32 %v44, 7
    %v46 = vsub.s32 0, %v45
    %v47 = vrot.slane %v42, %v46
    %v65 = vunpack.c.l.b16 %v22
    %v66 = vunpack.c.l.b16 %v23
    %v67 = vunpack.c.l.b16 %v24
    %v68 = vunpack.c.l.b16 %v25
    %v69 = vunpack.c.l.b16 %v26
    %v70 = vunpack.c.l.b16 %v27
    %v71 = vunpack.c.l.b16 %v28
    %v72 = vunpack.c.l.b16 %v29
    %v73 = vunpack.c.l.b16 %v30
    %v74 = vunpack.c.l.b16 %v31
    %v75 = vunpack.c.l.b16 %v32
    %v76 = vunpack.c.l.b16 %v33
    %v77 = vunpack.c.l.b16 %v34
    %v78 = vunpack.c.l.b16 %v35
    %v79 = vunpack.c.l.b16 %v36
    %v80 = vunpack.c.l.b16 %v37
    %v81 = vpack.c.b16 %v66, %v65
    %v82 = vpack.c.b16 %v68, %v67
    %v83 = vpack.c.b16 %v70, %v69
    %v84 = vpack.c.b16 %v72, %v71
    %v85 = vpack.c.b16 %v74, %v73
    %v86 = vpack.c.b16 %v76, %v75
    %v87 = vpack.c.b16 %v78, %v77
    %v88 = vpack.c.b16 %v80, %v79
    %v93 = vunpack.c.l.b16 %v38
    %v94 = vunpack.c.l.b16 %v39
    %v95 = vunpack.c.l.b16 %v40
    %v96 = vunpack.c.l.b16 %v41
    %v97 = vpack.c.b16 %v94, %v93
    %v98 = vpack.c.b16 %v96, %v95
    %vm101 = vcmask 261120
    %v103 = vsel %vm101, %v81, 0
    %v106 = vsel %vm101, %v82, 0
    %v109 = vsel %vm101, %v83, 0
    %v112 = vsel %vm101, %v84, 0
    %v115 = vsel %vm101, %v85, 0
    %v118 = vsel %vm101, %v86, 0
    %v121 = vsel %vm101, %v87, 0
    %v124 = vsel %vm101, %v88, 0
    %126 = vmatprep.subr.bf16.mxu0 0
    %127 = vmatpush1.bf16.msra.mxu0 %v97
    %128 = vmatprep.subr.bf16.mxu0 0
    %129 = vmatpush1.bf16.msra.mxu0 %v98
    %130 = vmatprep.subr.bf16.mxu0 0
    %131 = vmatpush1.bf16.msra.mxu0 0
    %132 = vmatprep.subr.bf16.mxu0 0
    %133 = vmatpush1.bf16.msra.mxu0 0
    %134 = vmatprep.subr.bf16.mxu0 0
    %135 = vmatpush1.bf16.msra.mxu0 0
    %136 = vmatprep.subr.bf16.mxu0 0
    %137 = vmatpush1.bf16.msra.mxu0 0
    %138 = vmatprep.subr.bf16.mxu0 0
    %139 = vmatpush1.bf16.msra.mxu0 0
    %140 = vmatprep.subr.bf16.mxu0 0
    %141 = vmatpush1.bf16.msra.mxu0 0
    %142 = vmatprep.subr.bf16.mxu0 0
    %143 = vmatpush1.bf16.msra.mxu0 0
    %144 = vmatprep.subr.bf16.mxu0 0
    %145 = vmatpush1.bf16.msra.mxu0 0
    %146 = vmatprep.subr.bf16.mxu0 0
    %147 = vmatpush1.bf16.msra.mxu0 0
    %148 = vmatprep.subr.bf16.mxu0 0
    %149 = vmatpush1.bf16.msra.mxu0 0
    %150 = vmatprep.subr.bf16.mxu0 0
    %151 = vmatpush1.bf16.msra.mxu0 0
    %152 = vmatprep.subr.bf16.mxu0 0
    %153 = vmatpush1.bf16.msra.mxu0 0
    %154 = vmatprep.subr.bf16.mxu0 0
    %155 = vmatpush1.bf16.msra.mxu0 0
    %156 = vmatprep.subr.bf16.mxu0 0
    %157 = vmatpush1.bf16.msra.mxu0 0
    %158 = vmatprep.mubr.bf16.mxu0 0
    %159 = vmatmul.mubr.bf16.gmra.mrb[0].mxu0 %v103
    %v160 = vpop.f32.mrb[0].mxu0
    %v161 = vadd.f32 %v47, %v160
    %v162 = vpop.f32.mrb[0].mxu0
    %v163 = vpop.f32.mrb[0].mxu0
    %v164 = vadd.f32 %v47, %v163
    %v165 = vpop.f32.mrb[0].mxu0
    %166 = vmatprep.mubr.bf16.mxu0 0
    %167 = vmatmul.mubr.bf16.gmra.mrb[0].mxu0 %v106
    %v168 = vpop.f32.mrb[0].mxu0
    %v169 = vadd.f32 %v47, %v168
    %v170 = vpop.f32.mrb[0].mxu0
    %v171 = vpop.f32.mrb[0].mxu0
    %v172 = vadd.f32 %v47, %v171
    %v173 = vpop.f32.mrb[0].mxu0
    %174 = vmatprep.mubr.bf16.mxu0 0
    %175 = vmatmul.mubr.bf16.gmra.mrb[0].mxu0 %v109
    %v176 = vpop.f32.mrb[0].mxu0
    %v177 = vadd.f32 %v47, %v176
    %v178 = vpop.f32.mrb[0].mxu0
    %v179 = vpop.f32.mrb[0].mxu0
    %v180 = vadd.f32 %v47, %v179
    %v181 = vpop.f32.mrb[0].mxu0
    %182 = vmatprep.mubr.bf16.mxu0 0
    %183 = vmatmul.mubr.bf16.gmra.mrb[0].mxu0 %v112
    %v184 = vpop.f32.mrb[0].mxu0
    %v185 = vadd.f32 %v47, %v184
    %v186 = vpop.f32.mrb[0].mxu0
    %v187 = vpop.f32.mrb[0].mxu0
    %v188 = vadd.f32 %v47, %v187
    %v189 = vpop.f32.mrb[0].mxu0
    %190 = vmatprep.mubr.bf16.mxu0 0
    %191 = vmatmul.mubr.bf16.gmra.mrb[0].mxu0 %v115
    %v192 = vpop.f32.mrb[0].mxu0
    %v193 = vadd.f32 %v47, %v192
    %v194 = vpop.f32.mrb[0].mxu0
    %v195 = vpop.f32.mrb[0].mxu0
    %v196 = vadd.f32 %v47, %v195
    %v197 = vpop.f32.mrb[0].mxu0
    %198 = vmatprep.mubr.bf16.mxu0 0
    %199 = vmatmul.mubr.bf16.gmra.mrb[0].mxu0 %v118
    %v200 = vpop.f32.mrb[0].mxu0
    %v201 = vadd.f32 %v47, %v200
    %v202 = vpop.f32.mrb[0].mxu0
    %v203 = vpop.f32.mrb[0].mxu0
    %v204 = vadd.f32 %v47, %v203
    %v205 = vpop.f32.mrb[0].mxu0
    %206 = vmatprep.mubr.bf16.mxu0 0
    %207 = vmatmul.mubr.bf16.gmra.mrb[0].mxu0 %v121
    %v208 = vpop.f32.mrb[0].mxu0
    %v209 = vadd.f32 %v47, %v208
    %v210 = vpop.f32.mrb[0].mxu0
    %v211 = vpop.f32.mrb[0].mxu0
    %v212 = vadd.f32 %v47, %v211
    %v213 = vpop.f32.mrb[0].mxu0
    %214 = vmatprep.mubr.bf16.mxu0 0
    %215 = vmatmul.mubr.bf16.gmra.mrb[0].mxu0 %v124
    %v216 = vpop.f32.mrb[0].mxu0
    %v217 = vadd.f32 %v47, %v216
    %v218 = vpop.f32.mrb[0].mxu0
    %v219 = vpop.f32.mrb[0].mxu0
    %v220 = vadd.f32 %v47, %v219
    %v221 = vpop.f32.mrb[0].mxu0
    %222 = vdwg.mxu0
    %v223 = vxor.u32 %v161, 2147483648
    %v224 = vxor.u32 %v164, 2147483648
    %v225 = vxor.u32 %v169, 2147483648
    %v226 = vxor.u32 %v172, 2147483648
    %v227 = vxor.u32 %v177, 2147483648
    %v228 = vxor.u32 %v180, 2147483648
    %v229 = vxor.u32 %v185, 2147483648
    %v230 = vxor.u32 %v188, 2147483648
    %v231 = vxor.u32 %v193, 2147483648
    %v232 = vxor.u32 %v196, 2147483648
    %v233 = vxor.u32 %v201, 2147483648
    %v234 = vxor.u32 %v204, 2147483648
    %v235 = vxor.u32 %v209, 2147483648
    %v236 = vxor.u32 %v212, 2147483648
    %v237 = vxor.u32 %v217, 2147483648
    %v238 = vxor.u32 %v220, 2147483648
    %v239 = vmul.f32 %v223, 1.442695
    %v240 = vpow.pop %v239
    %v241 = vmul.f32 %v224, 1.442695
    %v242 = vpow.pop %v241
    %v243 = vmul.f32 %v225, 1.442695
    %v244 = vpow.pop %v243
    %v245 = vmul.f32 %v226, 1.442695
    %v246 = vpow.pop %v245
    %v247 = vmul.f32 %v227, 1.442695
    %v248 = vpow.pop %v247
    %v249 = vmul.f32 %v228, 1.442695
    %v250 = vpow.pop %v249
    %v251 = vmul.f32 %v229, 1.442695
    %v252 = vpow.pop %v251
    %v253 = vmul.f32 %v230, 1.442695
    %v254 = vpow.pop %v253
    %v255 = vmul.f32 %v231, 1.442695
    %v256 = vpow.pop %v255
    %v257 = vmul.f32 %v232, 1.442695
    %v258 = vpow.pop %v257
    %v259 = vmul.f32 %v233, 1.442695
    %v260 = vpow.pop %v259
    %v261 = vmul.f32 %v234, 1.442695
    %v262 = vpow.pop %v261
    %v263 = vmul.f32 %v235, 1.442695
    %v264 = vpow.pop %v263
    %v265 = vmul.f32 %v236, 1.442695
    %v266 = vpow.pop %v265
    %v267 = vmul.f32 %v237, 1.442695
    %v268 = vpow.pop %v267
    %v269 = vmul.f32 %v238, 1.442695
    %v270 = vpow.pop %v269
    %v271 = vadd.f32 %v240, 1.0
    %v272 = vadd.f32 %v242, 1.0
    %v273 = vadd.f32 %v244, 1.0
    %v274 = vadd.f32 %v246, 1.0
    %v275 = vadd.f32 %v248, 1.0
    %v276 = vadd.f32 %v250, 1.0
    %v277 = vadd.f32 %v252, 1.0
    %v278 = vadd.f32 %v254, 1.0
    %v279 = vadd.f32 %v256, 1.0
    %v280 = vadd.f32 %v258, 1.0
    %v281 = vadd.f32 %v260, 1.0
    %v282 = vadd.f32 %v262, 1.0
    %v283 = vadd.f32 %v264, 1.0
    %v284 = vadd.f32 %v266, 1.0
    %v285 = vadd.f32 %v268, 1.0
    %v286 = vadd.f32 %v270, 1.0
    %v287 = vrcp.pop %v271
    %v288 = vmul.f32 1.0, %v287
    %v289 = vrcp.pop %v272
    %v290 = vmul.f32 1.0, %v289
    %v291 = vrcp.pop %v273
    %v292 = vmul.f32 1.0, %v291
    %v293 = vrcp.pop %v274
    %v294 = vmul.f32 1.0, %v293
    %v295 = vrcp.pop %v275
    %v296 = vmul.f32 1.0, %v295
    %v297 = vrcp.pop %v276
    %v298 = vmul.f32 1.0, %v297
    %v299 = vrcp.pop %v277
    %v300 = vmul.f32 1.0, %v299
    %v301 = vrcp.pop %v278
    %v302 = vmul.f32 1.0, %v301
    %v303 = vrcp.pop %v279
    %v304 = vmul.f32 1.0, %v303
    %v305 = vrcp.pop %v280
    %v306 = vmul.f32 1.0, %v305
    %v307 = vrcp.pop %v281
    %v308 = vmul.f32 1.0, %v307
    %v309 = vrcp.pop %v282
    %v310 = vmul.f32 1.0, %v309
    %v311 = vrcp.pop %v283
    %v312 = vmul.f32 1.0, %v311
    %v313 = vrcp.pop %v284
    %v314 = vmul.f32 1.0, %v313
    %v315 = vrcp.pop %v285
    %v316 = vmul.f32 1.0, %v315
    %v317 = vrcp.pop %v286
    %v318 = vmul.f32 1.0, %v317
    %v319 = vmul.f32 %v161, %v288
    %v320 = vmul.f32 %v164, %v290
    %v321 = vmul.f32 %v169, %v292
    %v322 = vmul.f32 %v172, %v294
    %v323 = vmul.f32 %v177, %v296
    %v324 = vmul.f32 %v180, %v298
    %v325 = vmul.f32 %v185, %v300
    %v326 = vmul.f32 %v188, %v302
    %v327 = vmul.f32 %v193, %v304
    %v328 = vmul.f32 %v196, %v306
    %v329 = vmul.f32 %v201, %v308
    %v330 = vmul.f32 %v204, %v310
    %v331 = vmul.f32 %v209, %v312
    %v332 = vmul.f32 %v212, %v314
    %v333 = vmul.f32 %v217, %v316
    %v334 = vmul.f32 %v220, %v318
    %v335 = vpack.c.bf16 %v320, %v319
    %v336 = vpack.c.bf16 %v322, %v321
    %v337 = vpack.c.bf16 %v324, %v323
    %v338 = vpack.c.bf16 %v326, %v325
    %v339 = vpack.c.bf16 %v328, %v327
    %v340 = vpack.c.bf16 %v330, %v329
    %v341 = vpack.c.bf16 %v332, %v331
    %v342 = vpack.c.bf16 %v334, %v333
    %v343 = vld [vmem:[%s3] sm:$0xf]
    %v344 = vld [vmem:[%s3 + $0x4] sm:$0xf]
    %v345 = vld [vmem:[%s3 + $0x8] sm:$0xf]
    %v346 = vld [vmem:[%s3 + $0xc] sm:$0xf]
    %v347 = vld [vmem:[%s3 + $0x10] sm:$0xf]
    %v348 = vld [vmem:[%s3 + $0x14] sm:$0xf]
    %v349 = vld [vmem:[%s3 + $0x18] sm:$0xf]
    %v350 = vld [vmem:[%s3 + $0x1c] sm:$0xf]
    %v351 = vld [vmem:[%s3 + $0x20] sm:$0xf]
    %v352 = vld [vmem:[%s3 + $0x24] sm:$0xf]
    %v353 = vld [vmem:[%s3 + $0x28] sm:$0xf]
    %v354 = vld [vmem:[%s3 + $0x2c] sm:$0xf]
    %v355 = vld [vmem:[%s3 + $0x30] sm:$0xf]
    %v356 = vld [vmem:[%s3 + $0x34] sm:$0xf]
    %v357 = vld [vmem:[%s3 + $0x38] sm:$0xf]
    %v358 = vld [vmem:[%s3 + $0x3c] sm:$0xf]
    %v359 = vld [vmem:[%s4] sm:$0x1]
    %v361 = vlaneseq
    %v362 = vshrl.u32 %v361, 7
    %v363 = vsub.s32 0, %v362
    %v364 = vrot.slane %v359, %v363
    %v382 = vunpack.c.l.b16 %v343
    %v383 = vunpack.c.l.b16 %v344
    %v384 = vunpack.c.l.b16 %v345
    %v385 = vunpack.c.l.b16 %v346
    %v386 = vunpack.c.l.b16 %v347
    %v387 = vunpack.c.l.b16 %v348
    %v388 = vunpack.c.l.b16 %v349
    %v389 = vunpack.c.l.b16 %v350
    %v390 = vunpack.c.l.b16 %v351
    %v391 = vunpack.c.l.b16 %v352
    %v392 = vunpack.c.l.b16 %v353
    %v393 = vunpack.c.l.b16 %v354
    %v394 = vunpack.c.l.b16 %v355
    %v395 = vunpack.c.l.b16 %v356
    %v396 = vunpack.c.l.b16 %v357
    %v397 = vunpack.c.l.b16 %v358
    %v398 = vpack.c.b16 %v383, %v382
    %v399 = vpack.c.b16 %v385, %v384
    %v400 = vpack.c.b16 %v387, %v386
    %v401 = vpack.c.b16 %v389, %v388
    %v402 = vpack.c.b16 %v391, %v390
    %v403 = vpack.c.b16 %v393, %v392
    %v404 = vpack.c.b16 %v395, %v394
    %v405 = vpack.c.b16 %v397, %v396
    %414 = vmatprep.subr.bf16.mxu0 0
    %415 = vmatpush1.bf16.msra.mxu0 %v398
    %416 = vmatprep.subr.bf16.mxu0 0
    %417 = vmatpush1.bf16.msra.mxu0 %v399
    %418 = vmatprep.subr.bf16.mxu0 0
    %419 = vmatpush1.bf16.msra.mxu0 %v400
    %420 = vmatprep.subr.bf16.mxu0 0
    %421 = vmatpush1.bf16.msra.mxu0 %v401
    %422 = vmatprep.subr.bf16.mxu0 0
    %423 = vmatpush1.bf16.msra.mxu0 %v402
    %424 = vmatprep.subr.bf16.mxu0 0
    %425 = vmatpush1.bf16.msra.mxu0 %v403
    %426 = vmatprep.subr.bf16.mxu0 0
    %427 = vmatpush1.bf16.msra.mxu0 %v404
    %428 = vmatprep.subr.bf16.mxu0 0
    %429 = vmatpush1.bf16.msra.mxu0 %v405
    %430 = vmatprep.subr.bf16.mxu0 0
    %431 = vmatpush1.bf16.msra.mxu0 0
    %432 = vmatprep.subr.bf16.mxu0 0
    %433 = vmatpush1.bf16.msra.mxu0 0
    %434 = vmatprep.subr.bf16.mxu0 0
    %435 = vmatpush1.bf16.msra.mxu0 0
    %436 = vmatprep.subr.bf16.mxu0 0
    %437 = vmatpush1.bf16.msra.mxu0 0
    %438 = vmatprep.subr.bf16.mxu0 0
    %439 = vmatpush1.bf16.msra.mxu0 0
    %440 = vmatprep.subr.bf16.mxu0 0
    %441 = vmatpush1.bf16.msra.mxu0 0
    %442 = vmatprep.subr.bf16.mxu0 0
    %443 = vmatpush1.bf16.msra.mxu0 0
    %444 = vmatprep.subr.bf16.mxu0 0
    %445 = vmatpush1.bf16.msra.mxu0 0
    %446 = vmatprep.mubr.bf16.mxu0 0
    %447 = vmatmul.mubr.bf16.gmra.mrb[0].mxu0 %v335
    %v448 = vpop.f32.mrb[0].mxu0
    %v449 = vadd.f32 %v364, %v448
    %v450 = vpop.f32.mrb[0].mxu0
    %v451 = vpop.f32.mrb[0].mxu0
    %v452 = vadd.f32 %v364, %v451
    %v453 = vpop.f32.mrb[0].mxu0
    %454 = vmatprep.mubr.bf16.mxu0 0
    %455 = vmatmul.mubr.bf16.gmra.mrb[0].mxu0 %v336
    %v456 = vpop.f32.mrb[0].mxu0
    %v457 = vadd.f32 %v364, %v456
    %v458 = vpop.f32.mrb[0].mxu0
    %v459 = vpop.f32.mrb[0].mxu0
    %v460 = vadd.f32 %v364, %v459
    %v461 = vpop.f32.mrb[0].mxu0
    %462 = vmatprep.mubr.bf16.mxu0 0
    %463 = vmatmul.mubr.bf16.gmra.mrb[0].mxu0 %v337
    %v464 = vpop.f32.mrb[0].mxu0
    %v465 = vadd.f32 %v364, %v464
    %v466 = vpop.f32.mrb[0].mxu0
    %v467 = vpop.f32.mrb[0].mxu0
    %v468 = vadd.f32 %v364, %v467
    %v469 = vpop.f32.mrb[0].mxu0
    %470 = vmatprep.mubr.bf16.mxu0 0
    %471 = vmatmul.mubr.bf16.gmra.mrb[0].mxu0 %v338
    %v472 = vpop.f32.mrb[0].mxu0
    %v473 = vadd.f32 %v364, %v472
    %v474 = vpop.f32.mrb[0].mxu0
    %v475 = vpop.f32.mrb[0].mxu0
    %v476 = vadd.f32 %v364, %v475
    %v477 = vpop.f32.mrb[0].mxu0
    %478 = vmatprep.mubr.bf16.mxu0 0
    %479 = vmatmul.mubr.bf16.gmra.mrb[0].mxu0 %v339
    %v480 = vpop.f32.mrb[0].mxu0
    %v481 = vadd.f32 %v364, %v480
    %v482 = vpop.f32.mrb[0].mxu0
    %v483 = vpop.f32.mrb[0].mxu0
    %v484 = vadd.f32 %v364, %v483
    %v485 = vpop.f32.mrb[0].mxu0
    %486 = vmatprep.mubr.bf16.mxu0 0
    %487 = vmatmul.mubr.bf16.gmra.mrb[0].mxu0 %v340
    %v488 = vpop.f32.mrb[0].mxu0
    %v489 = vadd.f32 %v364, %v488
    %v490 = vpop.f32.mrb[0].mxu0
    %v491 = vpop.f32.mrb[0].mxu0
    %v492 = vadd.f32 %v364, %v491
    %v493 = vpop.f32.mrb[0].mxu0
    %494 = vmatprep.mubr.bf16.mxu0 0
    %495 = vmatmul.mubr.bf16.gmra.mrb[0].mxu0 %v341
    %v496 = vpop.f32.mrb[0].mxu0
    %v497 = vadd.f32 %v364, %v496
    %v498 = vpop.f32.mrb[0].mxu0
    %v499 = vpop.f32.mrb[0].mxu0
    %v500 = vadd.f32 %v364, %v499
    %v501 = vpop.f32.mrb[0].mxu0
    %502 = vmatprep.mubr.bf16.mxu0 0
    %503 = vmatmul.mubr.bf16.gmra.mrb[0].mxu0 %v342
    %v504 = vpop.f32.mrb[0].mxu0
    %v505 = vadd.f32 %v364, %v504
    %v506 = vpop.f32.mrb[0].mxu0
    %v507 = vpop.f32.mrb[0].mxu0
    %v508 = vadd.f32 %v364, %v507
    %v509 = vpop.f32.mrb[0].mxu0
    %510 = vdwg.mxu0
    %511 = vst [vmem:[#allocation2] sm:$0xff] %v449
    %512 = vst [vmem:[#allocation2 + $0x8] sm:$0xff] %v452
    %513 = vst [vmem:[#allocation2 + $0x10] sm:$0xff] %v457
    %514 = vst [vmem:[#allocation2 + $0x18] sm:$0xff] %v460
    %515 = vst [vmem:[#allocation2 + $0x20] sm:$0xff] %v465
    %516 = vst [vmem:[#allocation2 + $0x28] sm:$0xff] %v468
    %517 = vst [vmem:[#allocation2 + $0x30] sm:$0xff] %v473
    %518 = vst [vmem:[#allocation2 + $0x38] sm:$0xff] %v476
    %519 = vst [vmem:[#allocation2 + $0x40] sm:$0xff] %v481
    %520 = vst [vmem:[#allocation2 + $0x48] sm:$0xff] %v484
    %521 = vst [vmem:[#allocation2 + $0x50] sm:$0xff] %v489
    %522 = vst [vmem:[#allocation2 + $0x58] sm:$0xff] %v492
    %523 = vst [vmem:[#allocation2 + $0x60] sm:$0xff] %v497
    %524 = vst [vmem:[#allocation2 + $0x68] sm:$0xff] %v500
    %525 = vst [vmem:[#allocation2 + $0x70] sm:$0xff] %v505
    %526 = vst [vmem:[#allocation2 + $0x78] sm:$0xff] %v508
    // Predicated region
    $region22: #{tpu_custom_call.1} parent=1 // pred_check
      _
    $region23: #{tpu_custom_call.1} parent=1 // pred_check_branch
      %528 = sbr.rel (0) target = $region25
    $region24: #{tpu_custom_call.1} parent=1 // pred_region
      %s530 = ssub.s32 2048, 2048
      %531 = vsyncadd [#allocation3], %s530
      %s532 = sshll.u32 [#allocation2], 4
      %s533 = int_to_ptr.vmem [resolvable:$true] %s532
      %538 = dma.vmem_to_hbm [thread:$0]  %s533, 2048, %s5, [#allocation3], 128, 128, 8
    $region25: #{tpu_custom_call.1} parent=1 // pred_fallthru
      _
    // Predicated region
    $region26: #{tpu_custom_call.1} parent=1 // pred_check
      _
    $region27: #{tpu_custom_call.1} parent=1 // pred_check_branch
      %540 = sbr.rel (0) target = $region29
    $region28: #{tpu_custom_call.1} parent=1 // pred_region
      %541 = dma.done [#allocation3], 2048
    $region29: #{tpu_custom_call.1} parent=1 // pred_fallthru
      _
    %542 = vsyncpa [#allocation3], 1

</llo_original>
